<compile_context>
chip_gen: v7x
topology: tpu7x:2x2x1
jax: 0.10.0
libtpu: 0.0.40
codegen_flags: <defaults>
</compile_context>

<pallas_src>
import functools

import jax
import jax.numpy as jnp
from jax.experimental import pallas as pl
from jax.experimental.pallas import tpu as pltpu


# ------------------------- Fused squeeze + excite + scale (main path) ------------------

def _se_fused_kernel(x_ref, w1_ref, b1_ref, w2_ref, b2_ref, o_ref, *, inv_hw):
    # x_ref : (1, C, HW)  native dtype (whole batch slab)
    # w1_ref: (C, Hpad) f32, b1_ref: (1, Hpad) f32   (Linear 1, pre-transposed / padded)
    # w2_ref: (Hpad, C) f32, b2_ref: (1, C)    f32   (Linear 2, pre-transposed / padded)
    # o_ref : (1, C, HW)  native dtype
    x = x_ref[...]

    # Squeeze: global mean over HW, accumulated in f32.
    # (An MXU dot against a ones matrix would offload this on v7x; neutral on
    #  v5e/v6e where the kernel stays HBM-bound, so keep the simple reduce.)
    se = jnp.sum(x.astype(jnp.float32), axis=-1) * inv_hw              # (1, C)

    # Excitation: C -> Hpad -> C (tiny matmuls, f32).
    h = jnp.dot(se, w1_ref[...], preferred_element_type=jnp.float32) + b1_ref[...]
    h = jnp.maximum(h, 0.0)                                            # ReLU
    z = jnp.dot(h, w2_ref[...], preferred_element_type=jnp.float32) + b2_ref[...]
    s = jax.nn.sigmoid(z)[:, :, None]                                  # (1, C, 1) f32

    # Scale: native-dtype broadcast multiply (no widen/narrow chain for bf16).
    o_ref[...] = (x * s.astype(x.dtype)).astype(o_ref.dtype)


# --------------------- Fallback pass 1: tiled HW reduce + excitation -------------------

def _reduce_excite_kernel(x_ref, w1_ref, b1_ref, w2_ref, b2_ref, s_ref, acc_ref,
                          *, inv_hw):
    # x_ref : (1, C, THW) native dtype (HW zero-padded to a multiple of 128)
    # s_ref : (1, C, 1) f32  per-channel scale output (written once, on last HW tile)
    # acc_ref: (1, C, 1) f32 scratch — C on sublanes, matching x/s layout.
    hw_i = pl.program_id(1)

    @pl.when(hw_i == 0)
    def _():
        acc_ref[...] = jnp.zeros_like(acc_ref)

    acc_ref[...] += jnp.sum(x_ref[...].astype(jnp.float32), axis=-1, keepdims=True)

    @pl.when(hw_i == pl.num_programs(1) - 1)
    def _():
        se = acc_ref[...][:, :, 0] * inv_hw                             # (1, C) mean
        h = jnp.dot(se, w1_ref[...], preferred_element_type=jnp.float32) + b1_ref[...]
        h = jnp.maximum(h, 0.0)                                         # ReLU
        z = jnp.dot(h, w2_ref[...], preferred_element_type=jnp.float32) + b2_ref[...]
        s_ref[...] = jax.nn.sigmoid(z)[:, :, None]                      # (1, C, 1)


# ------------------------- Fallback pass 2: broadcast multiply -------------------------

def _scale_kernel(x_ref, s_ref, o_ref):
    x = x_ref[...]
    o_ref[...] = (x * s_ref[...].astype(x.dtype)).astype(o_ref.dtype)


# ------------------------------------- Wrappers ----------------------------------------

def prepare_se_params(w1, b1, w2, b2):
    """Pad/transpose the PyTorch Linear params once (hoist out of the hot path).

    w1: (hidden, C), b1: (hidden,), w2: (C, hidden), b2: (C,).
    Padded hidden units have zero weights/bias -> ReLU(0)=0 and zero w2 rows -> no effect.
    """
    hidden, C = w1.shape
    hpad = max(8, hidden)
    w1_t = jnp.zeros((C, hpad), jnp.float32).at[:, :hidden].set(w1.T.astype(jnp.float32))
    b1_p = jnp.zeros((1, hpad), jnp.float32).at[0, :hidden].set(b1.astype(jnp.float32))
    w2_t = jnp.zeros((hpad, C), jnp.float32).at[:hidden, :].set(w2.T.astype(jnp.float32))
    b2_p = b2.reshape(1, C).astype(jnp.float32)
    return w1_t, b1_p, w2_t, b2_p


_VMEM_LIMIT = 32 << 20          # safe scoped limit on v5e/v6e/v7x
_FUSED_SLAB_BUDGET = 4 << 20    # per-batch C*HW slab; 2x in + 2x out + f32 widen < 32 MiB
_TILE_BUDGET = 4 << 20          # fallback lane-dense HW tile budget


def _pick_hw_tile(hw_pad, c, itemsize, tile_budget_bytes):
    """Largest multiple of 128 dividing hw_pad with tile bytes <= budget."""
    max_thw = max(128, (tile_budget_bytes // (c * itemsize)) // 128 * 128)
    t = min(hw_pad, max_thw)
    while hw_pad % t != 0:
        t -= 128
    return t


def _se_tiled(x3, params, true_hw):
    """Two-pass tiled fallback for slabs too large for the fused path."""
    w1_t, b1_p, w2_t, b2_p = params
    B, C, HW = x3.shape
    hpad = w1_t.shape[1]
    dtype = x3.dtype
    itemsize = jnp.dtype(dtype).itemsize

    # Zero-pad HW up to a multiple of 128: exact for the sum (mean uses 1/true_hw),
    # keeps lane-dense unmasked tiles and restores tile-size control.
    hw_pad = ((HW + 127) // 128) * 128
    x3p = jnp.pad(x3, ((0, 0), (0, 0), (0, hw_pad - HW))) if hw_pad != HW else x3

    thw = _pick_hw_tile(hw_pad, C, itemsize, _TILE_BUDGET)
    n_hw = hw_pad // thw

    s3 = pl.pallas_call(
        functools.partial(_reduce_excite_kernel, inv_hw=1.0 / true_hw),
        out_shape=jax.ShapeDtypeStruct((B, C, 1), jnp.float32),
        grid=(B, n_hw),
        in_specs=[
            pl.BlockSpec((1, C, thw), lambda b, k: (b, 0, k)),
            pl.BlockSpec((C, hpad), lambda b, k: (0, 0)),
            pl.BlockSpec((1, hpad), lambda b, k: (0, 0)),
            pl.BlockSpec((hpad, C), lambda b, k: (0, 0)),
            pl.BlockSpec((1, C), lambda b, k: (0, 0)),
        ],
        out_specs=pl.BlockSpec((1, C, 1), lambda b, k: (b, 0, 0)),
        scratch_shapes=[pltpu.VMEM((1, C, 1), jnp.float32)],
        compiler_params=pltpu.CompilerParams(
            dimension_semantics=("parallel", "arbitrary"),
            vmem_limit_bytes=_VMEM_LIMIT),
    )(x3p, w1_t, b1_p, w2_t, b2_p)

    out3p = pl.pallas_call(
        _scale_kernel,
        out_shape=jax.ShapeDtypeStruct((B, C, hw_pad), dtype),
        grid=(B, n_hw),
        in_specs=[
            pl.BlockSpec((1, C, thw), lambda b, k: (b, 0, k)),
            pl.BlockSpec((1, C, 1), lambda b, k: (b, 0, 0)),
        ],
        out_specs=pl.BlockSpec((1, C, thw), lambda b, k: (b, 0, k)),
        compiler_params=pltpu.CompilerParams(
            dimension_semantics=("parallel", "parallel"),
            vmem_limit_bytes=_VMEM_LIMIT),
    )(x3p, s3)

    return out3p[:, :, :HW] if hw_pad != HW else out3p


def se_block(x_nchw, params, *, force_tiled=False):
    """x_nchw: (B, C, H, W) in its native dtype (f32 or bf16). params from prepare_se_params."""
    w1_t, b1_p, w2_t, b2_p = params
    B, C, H, W = x_nchw.shape
    HW = H * W
    hpad = w1_t.shape[1]
    dtype = x_nchw.dtype
    itemsize = jnp.dtype(dtype).itemsize

    x3 = x_nchw.reshape(B, C, HW)          # native dtype, no copy-cast
    slab_bytes = C * HW * itemsize

    if force_tiled or slab_bytes > _FUSED_SLAB_BUDGET:
        out3 = _se_tiled(x3, params, HW)
        return out3.reshape(B, C, H, W)

    # ---- fused single-pass path: x read once, output written once ----
    fused_cost = pl.CostEstimate(
        flops=B * (2 * C * HW + 4 * C * hpad),
        transcendentals=B * C,
        bytes_accessed=2 * B * C * HW * itemsize
        + (C * hpad + hpad + hpad * C + C) * 4,
    )
    out3 = pl.pallas_call(
        functools.partial(_se_fused_kernel, inv_hw=1.0 / HW),
        out_shape=jax.ShapeDtypeStruct((B, C, HW), dtype),
        grid=(B,),
        in_specs=[
            pl.BlockSpec((1, C, HW), lambda b: (b, 0, 0)),
            pl.BlockSpec((C, hpad), lambda b: (0, 0)),
            pl.BlockSpec((1, hpad), lambda b: (0, 0)),
            pl.BlockSpec((hpad, C), lambda b: (0, 0)),
            pl.BlockSpec((1, C), lambda b: (0, 0)),
        ],
        out_specs=pl.BlockSpec((1, C, HW), lambda b: (b, 0, 0)),
        compiler_params=pltpu.CompilerParams(
            dimension_semantics=("parallel",),
            vmem_limit_bytes=_VMEM_LIMIT),
        cost_estimate=fused_cost,
    )(x3, w1_t, b1_p, w2_t, b2_p)

    return out3.reshape(B, C, H, W)


def se_block_ref(x, w1, b1, w2, b2):
    """Pure-JAX reference mirroring the PyTorch module."""
    se = jnp.mean(x.astype(jnp.float32), axis=(2, 3))         # (B, C)
    h = jnp.maximum(se @ w1.T + b1, 0.0)                      # (B, hidden)
    s = jax.nn.sigmoid(h @ w2.T + b2)                         # (B, C)
    return x.astype(jnp.float32) * s[:, :, None, None]


if __name__ == "__main__":
    # Shapes consistent with SEBlock(in_channels=32, reduction_ratio=16)
    B, C, H, W = 2, 32, 16, 16
    reduction_ratio = 16
    hidden = C // reduction_ratio   # = 2

    key = jax.random.PRNGKey(0)
    kx, k1, k2, k3, k4, kx2 = jax.random.split(key, 6)

    x = jax.random.normal(kx, (B, C, H, W), dtype=jnp.float32)
    # Deterministic synthetic parameters (PyTorch nn.Linear layout).
    w1 = jax.random.normal(k1, (hidden, C), dtype=jnp.float32) * 0.1
    b1 = jax.random.normal(k2, (hidden,), dtype=jnp.float32) * 0.1
    w2 = jax.random.normal(k3, (C, hidden), dtype=jnp.float32) * 0.1
    b2 = jax.random.normal(k4, (C,), dtype=jnp.float32) * 0.1

    # Hoist parameter prep out of the hot path; jit the apply.
    params = prepare_se_params(w1, b1, w2, b2)
    se_fused = jax.jit(se_block)
    se_tiled = jax.jit(functools.partial(se_block, force_tiled=True))

    # Fused single-pass path, f32: exact match to reference.
    out = jax.block_until_ready(se_fused(x, params))
    ref = se_block_ref(x, w1, b1, w2, b2)
    assert out.shape == (B, C, H, W)
    assert out.dtype == x.dtype
    assert jnp.allclose(out, ref, atol=1e-5, rtol=1e-5), "fused f32 mismatch vs reference"

    # Fused path, bf16 native-dtype I/O and native-dtype multiply.
    x_bf16 = x.astype(jnp.bfloat16)
    out_bf16 = jax.block_until_ready(se_fused(x_bf16, params))
    ref_bf16 = se_block_ref(x_bf16, w1, b1, w2, b2)
    assert out_bf16.dtype == jnp.bfloat16
    assert jnp.allclose(out_bf16.astype(jnp.float32), ref_bf16, atol=5e-2, rtol=5e-2), \
        "fused bf16 mismatch vs reference"

    # Tiled two-pass fallback with a non-multiple-of-128 spatial size (exercises
    # the HW zero-padding + masked-free lane-dense tiling).
    H2, W2 = 10, 10
    x2 = jax.random.normal(kx2, (B, C, H2, W2), dtype=jnp.float32)
    out2 = jax.block_until_ready(se_tiled(x2, params))
    ref2 = se_block_ref(x2, w1, b1, w2, b2)
    assert out2.shape == (B, C, H2, W2)
    assert jnp.allclose(out2, ref2, atol=1e-5, rtol=1e-5), "tiled fallback mismatch vs reference"

    print("KERNEL_OK")
</pallas_src>

<mosaic_0001>
module attributes {stable_mosaic.version = 11 : i64} {
  func.func @_se_fused_kernel(%arg0: i32, %arg1: memref<1x32x256xf32, #tpu.memory_space<vmem>>, %arg2: memref<32x8xf32, #tpu.memory_space<vmem>>, %arg3: memref<1x8xf32, #tpu.memory_space<vmem>>, %arg4: memref<8x32xf32, #tpu.memory_space<vmem>>, %arg5: memref<1x32xf32, #tpu.memory_space<vmem>>, %arg6: memref<1x32x256xf32, #tpu.memory_space<vmem>>) attributes {dimension_semantics = [#tpu.dimension_semantics<parallel>], iteration_bounds = array<i64: 2>, scalar_prefetch = 0 : i64, scratch_operands = 0 : i64, tpu.core_type = #tpu.core_type<tc>, window_params = [{transform_indices = @transform_0, window_bounds = array<i64: 1, 32, 256>}, {pipeline_mode = #tpu.pipeline_mode<synchronous>, transform_indices = @transform_1, window_bounds = array<i64: 32, 8>}, {pipeline_mode = #tpu.pipeline_mode<synchronous>, transform_indices = @transform_2, window_bounds = array<i64: 1, 8>}, {pipeline_mode = #tpu.pipeline_mode<synchronous>, transform_indices = @transform_3, window_bounds = array<i64: 8, 32>}, {pipeline_mode = #tpu.pipeline_mode<synchronous>, transform_indices = @transform_4, window_bounds = array<i64: 1, 32>}, {transform_indices = @transform_5, window_bounds = array<i64: 1, 32, 256>}]} {
    %c0 = arith.constant 0 : index
    %c0_0 = arith.constant 0 : index
    %c0_1 = arith.constant 0 : index
    %0 = vector.load %arg1[%c0, %c0_0, %c0_1] : memref<1x32x256xf32, #tpu.memory_space<vmem>>, vector<1x32x256xf32>
    %cst = arith.constant dense<0.000000e+00> : vector<1x32xf32>
    %1 = vector.multi_reduction <add>, %0, %cst [2] : vector<1x32x256xf32> to vector<1x32xf32>
    %cst_2 = arith.constant 3.906250e-03 : f32
    %2 = vector.broadcast %cst_2 : f32 to vector<1x32xf32>
    %3 = arith.mulf %1, %2 : vector<1x32xf32>
    %c0_3 = arith.constant 0 : index
    %c0_4 = arith.constant 0 : index
    %4 = vector.load %arg2[%c0_3, %c0_4] : memref<32x8xf32, #tpu.memory_space<vmem>>, vector<32x8xf32>
    %cst_5 = arith.constant dense<0.000000e+00> : vector<1x8xf32>
    %5 = tpu.matmul %3, %4, %cst_5 {dimension_numbers = #tpu.dot_dimension_numbers<[1], [0], [0], [1], [0, 0, 1, 1], [], []>} : vector<1x32xf32>, vector<32x8xf32>, vector<1x8xf32> -> vector<1x8xf32>
    %c0_6 = arith.constant 0 : index
    %c0_7 = arith.constant 0 : index
    %6 = vector.load %arg3[%c0_6, %c0_7] : memref<1x8xf32, #tpu.memory_space<vmem>>, vector<1x8xf32>
    %7 = arith.addf %5, %6 : vector<1x8xf32>
    %cst_8 = arith.constant 0.000000e+00 : f32
    %8 = vector.broadcast %cst_8 : f32 to vector<1x8xf32>
    %9 = arith.maximumf %7, %8 : vector<1x8xf32>
    %c0_9 = arith.constant 0 : index
    %c0_10 = arith.constant 0 : index
    %10 = vector.load %arg4[%c0_9, %c0_10] : memref<8x32xf32, #tpu.memory_space<vmem>>, vector<8x32xf32>
    %cst_11 = arith.constant dense<0.000000e+00> : vector<1x32xf32>
    %11 = tpu.matmul %9, %10, %cst_11 {dimension_numbers = #tpu.dot_dimension_numbers<[1], [0], [0], [1], [0, 0, 1, 1], [], []>} : vector<1x8xf32>, vector<8x32xf32>, vector<1x32xf32> -> vector<1x32xf32>
    %c0_12 = arith.constant 0 : index
    %c0_13 = arith.constant 0 : index
    %12 = vector.load %arg5[%c0_12, %c0_13] : memref<1x32xf32, #tpu.memory_space<vmem>>, vector<1x32xf32>
    %13 = arith.addf %11, %12 : vector<1x32xf32>
    %14 = arith.negf %13 : vector<1x32xf32>
    %15 = math.exp %14 : vector<1x32xf32>
    %cst_14 = arith.constant 1.000000e+00 : f32
    %16 = vector.broadcast %cst_14 : f32 to vector<1x32xf32>
    %17 = arith.addf %16, %15 : vector<1x32xf32>
    %18 = arith.divf %16, %17 : vector<1x32xf32>
    %19 = vector.shape_cast %18 : vector<1x32xf32> to vector<1x32x1xf32>
    %20 = vector.broadcast %19 : vector<1x32x1xf32> to vector<1x32x256xf32>
    %21 = arith.mulf %0, %20 : vector<1x32x256xf32>
    %c0_15 = arith.constant 0 : index
    %c0_16 = arith.constant 0 : index
    %c0_17 = arith.constant 0 : index
    %22 = vector.load %arg6[%c0_15, %c0_16, %c0_17] : memref<1x32x256xf32, #tpu.memory_space<vmem>>, vector<1x32x256xf32>
    tpu.vector_store %arg6[%c0_15, %c0_16, %c0_17], %21 {strides = array<i32>} : memref<1x32x256xf32, #tpu.memory_space<vmem>>, vector<1x32x256xf32>,
    return
  }
  func.func @transform_0(%arg0: i32) -> (i32, i32, i32) {
    %c0_i32 = arith.constant 0 : i32
    %c0_i32_0 = arith.constant 0 : i32
    %c0_i32_1 = arith.constant 0 : i32
    return %arg0, %c0_i32, %c0_i32_0 : i32, i32, i32
  }
  func.func @transform_1(%arg0: i32) -> (i32, i32) {
    %c0_i32 = arith.constant 0 : i32
    %c0_i32_0 = arith.constant 0 : i32
    %c0_i32_1 = arith.constant 0 : i32
    return %c0_i32, %c0_i32_0 : i32, i32
  }
  func.func @transform_2(%arg0: i32) -> (i32, i32) {
    %c0_i32 = arith.constant 0 : i32
    %c0_i32_0 = arith.constant 0 : i32
    %c0_i32_1 = arith.constant 0 : i32
    return %c0_i32, %c0_i32_0 : i32, i32
  }
  func.func @transform_3(%arg0: i32) -> (i32, i32) {
    %c0_i32 = arith.constant 0 : i32
    %c0_i32_0 = arith.constant 0 : i32
    %c0_i32_1 = arith.constant 0 : i32
    return %c0_i32, %c0_i32_0 : i32, i32
  }
  func.func @transform_4(%arg0: i32) -> (i32, i32) {
    %c0_i32 = arith.constant 0 : i32
    %c0_i32_0 = arith.constant 0 : i32
    %c0_i32_1 = arith.constant 0 : i32
    return %c0_i32, %c0_i32_0 : i32, i32
  }
  func.func @transform_5(%arg0: i32) -> (i32, i32, i32) {
    %c0_i32 = arith.constant 0 : i32
    %c0_i32_0 = arith.constant 0 : i32
    %c0_i32_1 = arith.constant 0 : i32
    return %arg0, %c0_i32, %c0_i32_0 : i32, i32, i32
  }
}

</mosaic_0001>

<llo_original>
// kernel: se_block.1
$region0: #{se_block.1}
  #allocation0 [shape = 'u32[]', space=smem, size = 0x4, offset = 0x4, fixed_abs, tag = 'smem constant byte address 0x4 - core index']
  #allocation1 [shape = 'u32[144,128]{1,0:T(1,128)}', space=vmem, size = 0x12000, scoped, tag = 'internal scratch']
  %s0 = inlined_call_operand.vmem [shape: f32[2,32,256], index: 0, kind: input, shape index: {}]
  %s1 = inlined_call_operand.vmem [shape: f32[32,8], index: 1, kind: input, shape index: {}]
  %s2 = inlined_call_operand.vmem [shape: f32[1,8], index: 2, kind: input, shape index: {}]
  %s3 = inlined_call_operand.vmem [shape: f32[8,32], index: 3, kind: input, shape index: {}]
  %s4 = inlined_call_operand.vmem [shape: f32[1,32], index: 4, kind: input, shape index: {}]
  %s5 = inlined_call_operand.vmem [shape: f32[2,32,256], index: 5, kind: output, shape index: {}]
  %s6 = sld [smem:[#allocation0]]
  $region53: #{se_block.1} parent=0
    _
  %s8 = ssub.s32 1, %s6
  %s9 = scalar_select 0, %s8, %s6
  loop: start=0, step=1, limit=4
  $region2: #{se_block.1} parent=0 // loop_pre_header
    _
  $region3: #{se_block.1} parent=0 // loop_header
    %s11 = sphi 0, %s15
    %p12 = scmp.ge.s32.totalorder %s11, 4
    %s21 = sphi 0, %s23
    %s24 = sphi 0, %s21
    %s25 = sphi 0, %s24
    %s41 = sphi 0, %s25
    %s45 = sphi 0, %s45
    %s47 = sphi 0, %s45
    %s48 = sphi 0, %s47
    %s62 = sphi 0, %s48
    %s66 = sphi 0, %s66
    %s68 = sphi 0, %s66
    %s69 = sphi 0, %s68
    %s83 = sphi 0, %s69
    %s87 = sphi 0, %s87
    %s89 = sphi 0, %s87
    %s90 = sphi 0, %s89
    %s104 = sphi 0, %s90
    %s108 = sphi 0, %s108
    %s110 = sphi 0, %s108
    %s111 = sphi 0, %s110
    %s125 = sphi 0, %s111
    %s131 = sphi 0, %s133
    %s134 = sphi 0, %s131
    %s135 = sphi 0, %s134
    %s151 = sphi 0, %s135
  $region4: #{se_block.1} parent=0 // loop_header_branch
    %14 = sbr.rel (%p12) target = $region8
  $region5: #{se_block.1} parent=0 // loop_body
    %s16 = ssub.s32 %s11, 1
    %s17 = ssub.s32 %s11, 2
    %s18 = sadd.s32 %s11, 1
    %s19 = ssub.s32 %s11, %s18
    %p20 = scmp.eq.s32.totalorder %s19, 0
    %s22 = sadd.s32 %s21, 1
    %s23 = scalar_select %p20, %s21, %s22
    %p26 = pneg %p20
    %p27 = scmp.eq.s32.totalorder %s11, 1
    %p28 = por %p26, %p27
    %p29 = scmp.ne.s32.totalorder %s21, %s24
    %p30 = scmp.eq.s32.totalorder %s11, 0
    %p31 = por %p29, %p30
    %p32 = scmp.ne.s32.totalorder %s21, %s24
    %p33 = scmp.eq.s32.totalorder %s16, 1
    %p34 = por %p32, %p33
    %p35 = scmp.ne.s32.totalorder %s24, %s25
    %p36 = scmp.eq.s32.totalorder %s16, 0
    %p37 = por %p35, %p36
    %p38 = scmp.ne.s32.totalorder %s24, %s25
    %p39 = scmp.eq.s32.totalorder %s17, 1
    %p40 = por %p38, %p39
    %p42 = scmp.ne.s32.totalorder %s25, %s41
    %p43 = scmp.eq.s32.totalorder %s17, 0
    %p44 = por %p42, %p43
    %s46 = sadd.s32 %s45, 1
    %p49 = scmp.eq.s32.totalorder %s11, 1
    %p50 = scmp.ne.s32.totalorder %s45, %s47
    %p51 = scmp.eq.s32.totalorder %s11, 0
    %p52 = por %p50, %p51
    %p53 = scmp.ne.s32.totalorder %s45, %s47
    %p54 = scmp.eq.s32.totalorder %s16, 1
    %p55 = por %p53, %p54
    %p56 = scmp.ne.s32.totalorder %s47, %s48
    %p57 = scmp.eq.s32.totalorder %s16, 0
    %p58 = por %p56, %p57
    %p59 = scmp.ne.s32.totalorder %s47, %s48
    %p60 = scmp.eq.s32.totalorder %s17, 1
    %p61 = por %p59, %p60
    %p63 = scmp.ne.s32.totalorder %s48, %s62
    %p64 = scmp.eq.s32.totalorder %s17, 0
    %p65 = por %p63, %p64
    %s67 = sadd.s32 %s66, 1
    %p70 = scmp.eq.s32.totalorder %s11, 1
    %p71 = scmp.ne.s32.totalorder %s66, %s68
    %p72 = scmp.eq.s32.totalorder %s11, 0
    %p73 = por %p71, %p72
    %p74 = scmp.ne.s32.totalorder %s66, %s68
    %p75 = scmp.eq.s32.totalorder %s16, 1
    %p76 = por %p74, %p75
    %p77 = scmp.ne.s32.totalorder %s68, %s69
    %p78 = scmp.eq.s32.totalorder %s16, 0
    %p79 = por %p77, %p78
    %p80 = scmp.ne.s32.totalorder %s68, %s69
    %p81 = scmp.eq.s32.totalorder %s17, 1
    %p82 = por %p80, %p81
    %p84 = scmp.ne.s32.totalorder %s69, %s83
    %p85 = scmp.eq.s32.totalorder %s17, 0
    %p86 = por %p84, %p85
    %s88 = sadd.s32 %s87, 1
    %p91 = scmp.eq.s32.totalorder %s11, 1
    %p92 = scmp.ne.s32.totalorder %s87, %s89
    %p93 = scmp.eq.s32.totalorder %s11, 0
    %p94 = por %p92, %p93
    %p95 = scmp.ne.s32.totalorder %s87, %s89
    %p96 = scmp.eq.s32.totalorder %s16, 1
    %p97 = por %p95, %p96
    %p98 = scmp.ne.s32.totalorder %s89, %s90
    %p99 = scmp.eq.s32.totalorder %s16, 0
    %p100 = por %p98, %p99
    %p101 = scmp.ne.s32.totalorder %s89, %s90
    %p102 = scmp.eq.s32.totalorder %s17, 1
    %p103 = por %p101, %p102
    %p105 = scmp.ne.s32.totalorder %s90, %s104
    %p106 = scmp.eq.s32.totalorder %s17, 0
    %p107 = por %p105, %p106
    %s109 = sadd.s32 %s108, 1
    %p112 = scmp.eq.s32.totalorder %s11, 1
    %p113 = scmp.ne.s32.totalorder %s108, %s110
    %p114 = scmp.eq.s32.totalorder %s11, 0
    %p115 = por %p113, %p114
    %p116 = scmp.ne.s32.totalorder %s108, %s110
    %p117 = scmp.eq.s32.totalorder %s16, 1
    %p118 = por %p116, %p117
    %p119 = scmp.ne.s32.totalorder %s110, %s111
    %p120 = scmp.eq.s32.totalorder %s16, 0
    %p121 = por %p119, %p120
    %p122 = scmp.ne.s32.totalorder %s110, %s111
    %p123 = scmp.eq.s32.totalorder %s17, 1
    %p124 = por %p122, %p123
    %p126 = scmp.ne.s32.totalorder %s111, %s125
    %p127 = scmp.eq.s32.totalorder %s17, 0
    %p128 = por %p126, %p127
    %s129 = ssub.s32 %s11, %s18
    %p130 = scmp.eq.s32.totalorder %s129, 0
    %s132 = sadd.s32 %s131, 1
    %s133 = scalar_select %p130, %s131, %s132
    %p136 = pneg %p130
    %p137 = scmp.eq.s32.totalorder %s11, 1
    %p138 = por %p136, %p137
    %p139 = scmp.ne.s32.totalorder %s131, %s134
    %p140 = scmp.eq.s32.totalorder %s11, 0
    %p141 = por %p139, %p140
    %p142 = scmp.ne.s32.totalorder %s131, %s134
    %p143 = scmp.eq.s32.totalorder %s16, 1
    %p144 = por %p142, %p143
    %p145 = scmp.ne.s32.totalorder %s134, %s135
    %p146 = scmp.eq.s32.totalorder %s16, 0
    %p147 = por %p145, %p146
    %p148 = scmp.ne.s32.totalorder %s134, %s135
    %p149 = scmp.eq.s32.totalorder %s17, 1
    %p150 = por %p148, %p149
    %p152 = scmp.ne.s32.totalorder %s135, %s151
    %p153 = scmp.eq.s32.totalorder %s17, 0
    %p154 = por %p152, %p153
    %p155 = scmp.le.s32.totalorder 1, %s11
    %p156 = scmp.lt.s32.totalorder %s11, 3
    %p157 = pnand %p155, %p156
    %p158 = pneg %p157
    // Predicated region
    $region9: #{se_block.1} parent=5 // pred_check
      _
    $region10: #{se_block.1} parent=5 // pred_check_branch
      %160 = sbr.rel (%p157) target = $region12
    $region11: #{se_block.1} parent=5 // pred_region
      %s161 = ssub.s32 %s11, 1
      // Predicated region
      $region13: #{se_block.1} parent=11 // pred_check
        %p162 = pneg %p58
      $region14: #{se_block.1} parent=11 // pred_check_branch
        %164 = sbr.rel (%p162) target = $region16
      $region15: #{se_block.1} parent=11 // pred_region
        _
      $region16: #{se_block.1} parent=11 // pred_fallthru
        _
      // Predicated region
      $region17: #{se_block.1} parent=11 // pred_check
        %p165 = pneg %p79
      $region18: #{se_block.1} parent=11 // pred_check_branch
        %167 = sbr.rel (%p165) target = $region20
      $region19: #{se_block.1} parent=11 // pred_region
        _
      $region20: #{se_block.1} parent=11 // pred_fallthru
        _
      // Predicated region
      $region21: #{se_block.1} parent=11 // pred_check
        %p168 = pneg %p100
      $region22: #{se_block.1} parent=11 // pred_check_branch
        %170 = sbr.rel (%p168) target = $region24
      $region23: #{se_block.1} parent=11 // pred_region
        _
      $region24: #{se_block.1} parent=11 // pred_fallthru
        _
      // Predicated region
      $region25: #{se_block.1} parent=11 // pred_check
        %p171 = pneg %p121
      $region26: #{se_block.1} parent=11 // pred_check_branch
        %173 = sbr.rel (%p171) target = $region28
      $region27: #{se_block.1} parent=11 // pred_region
        _
      $region28: #{se_block.1} parent=11 // pred_fallthru
        _
    $region12: #{se_block.1} parent=5 // pred_fallthru
      _
    %p174 = scmp.lt.s32.totalorder %s11, 2
    // Predicated region
    $region29: #{se_block.1} parent=5 // pred_check
      %p175 = pneg %p174
    $region30: #{se_block.1} parent=5 // pred_check_branch
      %177 = sbr.rel (%p175) target = $region32
    $region31: #{se_block.1} parent=5 // pred_region
      // Predicated region
      $region33: #{se_block.1} parent=31 // pred_check
        %p178 = pneg %p31
      $region34: #{se_block.1} parent=31 // pred_check_branch
        %180 = sbr.rel (%p178) target = $region36
      $region35: #{se_block.1} parent=31 // pred_region
        %p181 = scmp.lt.s32.totalorder %s11, 1
        %s182 = scalar_select %p181, %s11, 1
        %s183 = smul.addr %s182, 8
        %s184 = smul.addr %s183, 8
        %s185 = scalar_lea.vmem %s0, %s184
      $region36: #{se_block.1} parent=31 // pred_fallthru
        _
    $region32: #{se_block.1} parent=5 // pred_fallthru
      _
    %p186 = scmp.le.s32.totalorder 1, %s11
    %p187 = scmp.lt.s32.totalorder %s11, 3
    %p188 = pnand %p186, %p187
    %p189 = pneg %p188
    // Predicated region
    $region37: #{se_block.1} parent=5 // pred_check
      _
    $region38: #{se_block.1} parent=5 // pred_check_branch
      %191 = sbr.rel (%p188) target = $region40
    $region39: #{se_block.1} parent=5 // pred_region
      %s192 = ssub.s32 %s11, 1
      %p193 = scmp.lt.s32.totalorder %s16, 1
      %s194 = scalar_select %p193, %s16, 1
      %s195 = smul.addr %s194, 8
      %s196 = smul.addr %s195, 8
      %s197 = scalar_lea.vmem %s0, %s196
      %p198 = pneg %p37
      %p199 = pneg %p34
      %p200 = pneg %p58
      %p201 = pneg %p55
      %p202 = pneg %p79
      %p203 = pneg %p76
      %p204 = pneg %p100
      %p205 = pneg %p97
      %p206 = pneg %p121
      %p207 = pneg %p118
      %p208 = pneg %p147
      %p209 = pneg %p144
      %p210 = scmp.lt.s32.totalorder %s16, 1
      %s211 = scalar_select %p210, %s16, 1
      %s212 = smul.addr %s211, 8
      %s213 = smul.addr %s212, 8
      %s214 = scalar_lea.vmem %s5, %s213
      %p215 = scmp.lt.s32.totalorder %s16, 1
      %s216 = scalar_select %p215, %s16, 1
      %s217 = smul.addr %s216, 8
      %s218 = smul.addr %s217, 8
      %s219 = scalar_lea.vmem %s0, %s218
      %p220 = scmp.lt.s32.totalorder %s16, 1
      %s221 = scalar_select %p220, %s16, 1
      %s222 = smul.addr %s221, 8
      %s223 = smul.addr %s222, 8
      %s224 = scalar_lea.vmem %s5, %s223
      %v225 = vld [vmem:[%s219] sm:$0xff]
      %v226 = vld [vmem:[%s219 + $0x8] sm:$0xff]
      %v227 = vld [vmem:[%s219 + $0x10] sm:$0xff]
      %v228 = vld [vmem:[%s219 + $0x18] sm:$0xff]
      %v229 = vld [vmem:[%s219 + $0x20] sm:$0xff]
      %v230 = vld [vmem:[%s219 + $0x28] sm:$0xff]
      %v231 = vld [vmem:[%s219 + $0x30] sm:$0xff]
      %v232 = vld [vmem:[%s219 + $0x38] sm:$0xff]
      %v233 = vadd.f32 %v225, %v226
      %234 = vadd.xlane.f32.xlu0 %v233
      %v235 = vpop.xlane.xlu0 %234
      %v236 = vadd.f32 %v227, %v228
      %237 = vadd.xlane.f32.xlu0 %v236
      %v238 = vpop.xlane.xlu0 %237
      %v239 = vadd.f32 %v229, %v230
      %240 = vadd.xlane.f32.xlu0 %v239
      %v241 = vpop.xlane.xlu0 %240
      %v242 = vadd.f32 %v231, %v232
      %243 = vadd.xlane.f32.xlu0 %v242
      %v244 = vpop.xlane.xlu0 %243
      %v245 = vmul.f32 %v235, 0.00390625
      %v246 = vmul.f32 %v238, 0.00390625
      %v247 = vmul.f32 %v241, 0.00390625
      %v248 = vmul.f32 %v244, 0.00390625
      %v249 = vld [vmem:[%s1] sm:$0xff]
      %v250 = vld [vmem:[%s1 + $0x8] sm:$0xff]
      %v251 = vld [vmem:[%s1 + $0x10] sm:$0xff]
      %v252 = vld [vmem:[%s1 + $0x18] sm:$0xff]
      %v253 = vld [vmem:[%s2] sm:$0x1]
      %v258 = vlaneseq
      %v259 = vand.u32 %v258, 127
      %v260 = vlaneseq
      %v261 = vshrl.u32 %v260, 7
      %v262 = vsub.s32 %v259, %v261
      %v263 = vrot.slane %v245, %v262
      %v264 = vadd.s32 %v259, 4294967288
      %v265 = vlaneseq
      %v266 = vshrl.u32 %v265, 7
      %v267 = vsub.s32 %v264, %v266
      %v268 = vrot.slane %v246, %v267
      %vm269 = vcmask 130112
      %v270 = vsel %vm269, %v268, %v263
      %v271 = vadd.s32 %v259, 4294967280
      %v272 = vlaneseq
      %v273 = vshrl.u32 %v272, 7
      %v274 = vsub.s32 %v271, %v273
      %v275 = vrot.slane %v247, %v274
      %vm276 = vcmask 195712
      %v277 = vsel %vm276, %v275, %v270
      %v278 = vadd.s32 %v259, 4294967272
      %v279 = vlaneseq
      %v280 = vshrl.u32 %v279, 7
      %v281 = vsub.s32 %v278, %v280
      %v282 = vrot.slane %v248, %v281
      %vm283 = vcmask 261312
      %v284 = vsel %vm283, %v282, %v277
      %vm285 = vcmask 261120
      %v286 = vsel %vm285, %v284, 0
      %288 = vmatprep.subr.mxu0 0.0
      %289 = vmatpush1.msra.mxu0 %v249
      %290 = vmatprep.subr.mxu0 0.0
      %291 = vmatpush1.msra.mxu0 %v250
      %292 = vmatprep.subr.mxu0 0.0
      %293 = vmatpush1.msra.mxu0 %v251
      %294 = vmatprep.subr.mxu0 0.0
      %295 = vmatpush1.msra.mxu0 %v252
      %296 = vmatprep.subr.mxu0 0.0
      %297 = vmatpush1.msra.mxu0 0.0
      %298 = vmatprep.subr.mxu0 0.0
      %299 = vmatpush1.msra.mxu0 0.0
      %300 = vmatprep.subr.mxu0 0.0
      %301 = vmatpush1.msra.mxu0 0.0
      %302 = vmatprep.subr.mxu0 0.0
      %303 = vmatpush1.msra.mxu0 0.0
      %304 = vmatprep.subr.mxu0 0.0
      %305 = vmatpush1.msra.mxu0 0.0
      %306 = vmatprep.subr.mxu0 0.0
      %307 = vmatpush1.msra.mxu0 0.0
      %308 = vmatprep.subr.mxu0 0.0
      %309 = vmatpush1.msra.mxu0 0.0
      %310 = vmatprep.subr.mxu0 0.0
      %311 = vmatpush1.msra.mxu0 0.0
      %312 = vmatprep.subr.mxu0 0.0
      %313 = vmatpush1.msra.mxu0 0.0
      %314 = vmatprep.subr.mxu0 0.0
      %315 = vmatpush1.msra.mxu0 0.0
      %316 = vmatprep.subr.mxu0 0.0
      %317 = vmatpush1.msra.mxu0 0.0
      %318 = vmatprep.subr.mxu0 0.0
      %319 = vmatpush1.msra.mxu0 0.0
      %320 = vmatprep.subr.mxu0 0.0
      %321 = vmatpush1.msra.mxu0 0.0
      %322 = vmatprep.subr.mxu0 0.0
      %323 = vmatpush1.msra.mxu0 0.0
      %324 = vmatprep.subr.mxu0 0.0
      %325 = vmatpush1.msra.mxu0 0.0
      %326 = vmatprep.subr.mxu0 0.0
      %327 = vmatpush1.msra.mxu0 0.0
      %328 = vmatprep.subr.mxu0 0.0
      %329 = vmatpush1.msra.mxu0 0.0
      %330 = vmatprep.subr.mxu0 0.0
      %331 = vmatpush1.msra.mxu0 0.0
      %332 = vmatprep.subr.mxu0 0.0
      %333 = vmatpush1.msra.mxu0 0.0
      %334 = vmatprep.subr.mxu0 0.0
      %335 = vmatpush1.msra.mxu0 0.0
      %336 = vmatprep.subr.mxu0 0.0
      %337 = vmatpush1.msra.mxu0 0.0
      %338 = vmatprep.subr.mxu0 0.0
      %339 = vmatpush1.msra.mxu0 0.0
      %340 = vmatprep.subr.mxu0 0.0
      %341 = vmatpush1.msra.mxu0 0.0
      %342 = vmatprep.subr.mxu0 0.0
      %343 = vmatpush1.msra.mxu0 0.0
      %344 = vmatprep.subr.mxu0 0.0
      %345 = vmatpush1.msra.mxu0 0.0
      %346 = vmatprep.subr.mxu0 0.0
      %347 = vmatpush1.msra.mxu0 0.0
      %348 = vmatprep.subr.mxu0 0.0
      %349 = vmatpush1.msra.mxu0 0.0
      %350 = vmatprep.subr.mxu0 0.0
      %351 = vmatpush1.msra.mxu0 0.0
      %352 = vmatprep.mubr.f32.mxu0 0.0
      %353 = vmatmul.mubr.f32.gmra.mrb[0].mxu0 %v286
      %v354 = vpop.f32.mrb[0].mxu0
      %v355 = vadd.f32 %v253, %v354
      %v356 = vpop.f32.mrb[0].mxu0
      %357 = vdwg.mxu0
      %v358 = vmax.f32 %v355, 0.0
      %v359 = vld [vmem:[%s3] sm:$0xff]
      %v360 = vld [vmem:[%s4] sm:$0x1]
      %vm361 = vcmask 64512
      %v363 = vsel %vm361, %v358, 0
      %365 = vmatprep.subr.mxu0 0.0
      %366 = vmatpush1.msra.mxu0 %v359
      %367 = vmatprep.subr.mxu0 0.0
      %368 = vmatpush1.msra.mxu0 0.0
      %369 = vmatprep.subr.mxu0 0.0
      %370 = vmatpush1.msra.mxu0 0.0
      %371 = vmatprep.subr.mxu0 0.0
      %372 = vmatpush1.msra.mxu0 0.0
      %373 = vmatprep.subr.mxu0 0.0
      %374 = vmatpush1.msra.mxu0 0.0
      %375 = vmatprep.subr.mxu0 0.0
      %376 = vmatpush1.msra.mxu0 0.0
      %377 = vmatprep.subr.mxu0 0.0
      %378 = vmatpush1.msra.mxu0 0.0
      %379 = vmatprep.subr.mxu0 0.0
      %380 = vmatpush1.msra.mxu0 0.0
      %381 = vmatprep.subr.mxu0 0.0
      %382 = vmatpush1.msra.mxu0 0.0
      %383 = vmatprep.subr.mxu0 0.0
      %384 = vmatpush1.msra.mxu0 0.0
      %385 = vmatprep.subr.mxu0 0.0
      %386 = vmatpush1.msra.mxu0 0.0
      %387 = vmatprep.subr.mxu0 0.0
      %388 = vmatpush1.msra.mxu0 0.0
      %389 = vmatprep.subr.mxu0 0.0
      %390 = vmatpush1.msra.mxu0 0.0
      %391 = vmatprep.subr.mxu0 0.0
      %392 = vmatpush1.msra.mxu0 0.0
      %393 = vmatprep.subr.mxu0 0.0
      %394 = vmatpush1.msra.mxu0 0.0
      %395 = vmatprep.subr.mxu0 0.0
      %396 = vmatpush1.msra.mxu0 0.0
      %397 = vmatprep.subr.mxu0 0.0
      %398 = vmatpush1.msra.mxu0 0.0
      %399 = vmatprep.subr.mxu0 0.0
      %400 = vmatpush1.msra.mxu0 0.0
      %401 = vmatprep.subr.mxu0 0.0
      %402 = vmatpush1.msra.mxu0 0.0
      %403 = vmatprep.subr.mxu0 0.0
      %404 = vmatpush1.msra.mxu0 0.0
      %405 = vmatprep.subr.mxu0 0.0
      %406 = vmatpush1.msra.mxu0 0.0
      %407 = vmatprep.subr.mxu0 0.0
      %408 = vmatpush1.msra.mxu0 0.0
      %409 = vmatprep.subr.mxu0 0.0
      %410 = vmatpush1.msra.mxu0 0.0
      %411 = vmatprep.subr.mxu0 0.0
      %412 = vmatpush1.msra.mxu0 0.0
      %413 = vmatprep.subr.mxu0 0.0
      %414 = vmatpush1.msra.mxu0 0.0
      %415 = vmatprep.subr.mxu0 0.0
      %416 = vmatpush1.msra.mxu0 0.0
      %417 = vmatprep.subr.mxu0 0.0
      %418 = vmatpush1.msra.mxu0 0.0
      %419 = vmatprep.subr.mxu0 0.0
      %420 = vmatpush1.msra.mxu0 0.0
      %421 = vmatprep.subr.mxu0 0.0
      %422 = vmatpush1.msra.mxu0 0.0
      %423 = vmatprep.subr.mxu0 0.0
      %424 = vmatpush1.msra.mxu0 0.0
      %425 = vmatprep.subr.mxu0 0.0
      %426 = vmatpush1.msra.mxu0 0.0
      %427 = vmatprep.subr.mxu0 0.0
      %428 = vmatpush1.msra.mxu0 0.0
      %429 = vmatprep.mubr.f32.mxu0 0.0
      %430 = vmatmul.mubr.f32.gmra.mrb[0].mxu0 %v363
      %v431 = vpop.f32.mrb[0].mxu0
      %v432 = vadd.f32 %v360, %v431
      %v433 = vpop.f32.mrb[0].mxu0
      %434 = vdwg.mxu0
      %v435 = vxor.u32 %v432, 2147483648
      %v436 = vmul.f32 %v435, 1.442695
      %v437 = vpow.pop %v436
      %v438 = vadd.f32 %v437, 1.0
      %v439 = vrcp.pop %v438
      %v440 = vmul.f32 1.0, %v439
      %v441 = vlaneseq
      %v442 = vshrl.u32 %v441, 7
      %v443 = vsub.s32 0, %v442
      %v444 = vrot.slane %v440, %v443
      %446 = vbcast.lane.b32.xlu0 %v444, 256
      %v447 = vpop.permute.xlu0 %446
      %s449 = sor.u32 256, 8
      %450 = vbcast.lane.b32.xlu0 %v444, %s449
      %v451 = vpop.permute.xlu0 %450
      %s453 = sor.u32 256, 16
      %454 = vbcast.lane.b32.xlu0 %v444, %s453
      %v455 = vpop.permute.xlu0 %454
      %s457 = sor.u32 256, 24
      %458 = vbcast.lane.b32.xlu0 %v444, %s457
      %v459 = vpop.permute.xlu0 %458
      %v460 = vmul.f32 %v225, %v447
      %v461 = vmul.f32 %v226, %v447
      %v462 = vmul.f32 %v227, %v451
      %v463 = vmul.f32 %v228, %v451
      %v464 = vmul.f32 %v229, %v455
      %v465 = vmul.f32 %v230, %v455
      %v466 = vmul.f32 %v231, %v459
      %v467 = vmul.f32 %v232, %v459
      %468 = vst [vmem:[%s224] sm:$0xff] %v460
      %469 = vst [vmem:[%s224 + $0x8] sm:$0xff] %v461
      %470 = vst [vmem:[%s224 + $0x10] sm:$0xff] %v462
      %471 = vst [vmem:[%s224 + $0x18] sm:$0xff] %v463
      %472 = vst [vmem:[%s224 + $0x20] sm:$0xff] %v464
      %473 = vst [vmem:[%s224 + $0x28] sm:$0xff] %v465
      %474 = vst [vmem:[%s224 + $0x30] sm:$0xff] %v466
      %475 = vst [vmem:[%s224 + $0x38] sm:$0xff] %v467
      %p476 = scmp.lt.s32.totalorder %s16, 1
      %s477 = scalar_select %p476, %s16, 1
      %s478 = smul.addr %s477, 8
      %s479 = smul.addr %s478, 8
      %s480 = scalar_lea.vmem %s5, %s479
      // Predicated region
      $region41: #{se_block.1} parent=39 // pred_check
        %p481 = pneg %p144
      $region42: #{se_block.1} parent=39 // pred_check_branch
        %483 = sbr.rel (%p481) target = $region44
      $region43: #{se_block.1} parent=39 // pred_region
        _
      $region44: #{se_block.1} parent=39 // pred_fallthru
        _
    $region40: #{se_block.1} parent=5 // pred_fallthru
      _
    %p484 = scmp.le.s32.totalorder 2, %s11
    // Predicated region
    $region45: #{se_block.1} parent=5 // pred_check
      %p485 = pneg %p484
    $region46: #{se_block.1} parent=5 // pred_check_branch
      %487 = sbr.rel (%p485) target = $region48
    $region47: #{se_block.1} parent=5 // pred_region
      %s488 = ssub.s32 %s11, 2
      // Predicated region
      $region49: #{se_block.1} parent=47 // pred_check
        %p489 = pneg %p150
      $region50: #{se_block.1} parent=47 // pred_check_branch
        %491 = sbr.rel (%p489) target = $region52
      $region51: #{se_block.1} parent=47 // pred_region
        %p492 = scmp.lt.s32.totalorder %s17, 1
        %s493 = scalar_select %p492, %s17, 1
        %s494 = smul.addr %s493, 8
        %s495 = smul.addr %s494, 8
        %s496 = scalar_lea.vmem %s5, %s495
      $region52: #{se_block.1} parent=47 // pred_fallthru
        _
    $region48: #{se_block.1} parent=5 // pred_fallthru
      _
  $region6: #{se_block.1} parent=0 // loop_footer
    %s15 = sadd.s32 1, %s11
  $region7: #{se_block.1} parent=0 // loop_footer_branch
    %10 = sbr.rel target = $region3
  $region8: #{se_block.1} parent=0 // loop_exit
    _

</llo_original>
